<compile_context>
chip_gen: v5e
topology: v5e:2x2
jax: 0.10.0
libtpu: 0.0.40
codegen_flags: <defaults>
</compile_context>

<pallas_src>
import functools

import jax
import jax.numpy as jnp
from jax.experimental import pallas as pl
from jax.experimental.pallas import tpu as pltpu


# ---------------------------------------------------------------------------
# Fused MINE kernel
# ---------------------------------------------------------------------------
def _mine_kernel(x_ref, y_ref, perm_ref, w1_ref, b1_ref, w2_ref, b2_ref,
                 o_ref, *, d):
    """Fully fused MINE forward.

    x/y  : (B, D)   f32   flattened samples
    perm : (B, B)   f32   one-hot row-gather matrix (y_shuffle = perm @ y)
    w1   : (2D, H)  f32   first Linear weight, [x-part ; y-part] stacked
    b1   : (1, H)   f32
    w2   : (1, H)   f32   second Linear weight as a row vector
    b2   : (1, 1)   f32
    o    : (1, 1)   f32   lower bound (nan/inf guard applied outside)
    """
    f32 = jnp.float32
    bf16 = jnp.bfloat16

    # ---- first Linear on the MXU (bf16 in, f32 accumulate) ----------------
    x = x_ref[...].astype(bf16)                         # (B, D)
    y = y_ref[...].astype(bf16)                         # (B, D)
    w1x = w1_ref[pl.ds(0, d), :].astype(bf16)           # (D, H) static slice
    w1y = w1_ref[pl.ds(d, d), :].astype(bf16)           # (D, H) static slice

    xp = jnp.dot(x, w1x, preferred_element_type=f32)    # (B, H) shared T0/T1
    yp = jnp.dot(y, w1y, preferred_element_type=f32)    # (B, H)
    # y_shuffle projection == exact row gather of yp (one-hot matmul, tiny).
    sp = jnp.dot(perm_ref[...], yp, preferred_element_type=f32)   # (B, H)

    b1 = b1_ref[...]
    h0 = jnp.maximum(xp + yp + b1, 0.0)                 # ReLU, f32 epilogue
    h1 = jnp.maximum(xp + sp + b1, 0.0)

    # ---- second Linear (H -> 1): VPU multiply + lane reduce ----------------
    w2 = w2_ref[...]                                    # (1, H)
    b2 = b2_ref[...]                                    # (1, 1)
    t0 = jnp.sum(h0 * w2, axis=-1, keepdims=True) + b2  # (B, 1)
    t1 = jnp.sum(h1 * w2, axis=-1, keepdims=True) + b2  # (B, 1)

    inv_b = 1.0 / t0.shape[0]
    mean_t0 = jnp.sum(t0, axis=0, keepdims=True) * inv_b            # (1, 1)

    # log(mean(exp(T1))) computed max-shifted (identical math, overflow-safe)
    m = jnp.max(t1, axis=0, keepdims=True)                          # (1, 1)
    mean_e = jnp.sum(jnp.exp(t1 - m), axis=0, keepdims=True) * inv_b
    log_mean_exp = m + jnp.log(mean_e)                              # (1, 1)

    o_ref[...] = mean_t0 - log_mean_exp


# ---------------------------------------------------------------------------
# Wrapper
# ---------------------------------------------------------------------------
@jax.jit
def mine_forward(params, x_samples, y_samples, key):
    B = y_samples.shape[0]
    x = x_samples.reshape(B, -1).astype(jnp.float32)
    y = y_samples.reshape(B, -1).astype(jnp.float32)
    D = x.shape[1]

    # torch.randint(sample_size, (sample_size,)) -> sample WITH replacement.
    idx = jax.random.randint(key, (B,), 0, B)
    # The row gather is expressed as a tiny (B, B) one-hot matrix and applied
    # to the (B, H) projection INSIDE the kernel -> y_shuffle never exists.
    perm = jax.nn.one_hot(idx, B, dtype=jnp.float32)

    # Only the tiny params get wrapper-side reshapes; the big w1/x/y are
    # passed untouched (single HBM pass, in-kernel cast/split).
    b1 = params["b1"].reshape(1, -1).astype(jnp.float32)
    w2 = params["w2"].reshape(1, -1).astype(jnp.float32)
    b2 = params["b2"].reshape(1, 1).astype(jnp.float32)

    vmem = pl.BlockSpec(memory_space=pltpu.MemorySpace.VMEM)
    lb = pl.pallas_call(
        functools.partial(_mine_kernel, d=D),
        out_shape=jax.ShapeDtypeStruct((1, 1), jnp.float32),
        in_specs=[vmem] * 7,
        out_specs=vmem,
    )(x, y, perm, params["w1"].astype(jnp.float32), b1, w2, b2)

    lb = lb[0, 0]
    # "Detected abnormal lowerbound value ... set lowerbound to 0!"
    # TODO(synk): the debug print in the original module is replaced by a
    # silent jnp.where guard (no device-side printing in the hot path).
    return jnp.where(jnp.isnan(lb) | jnp.isinf(lb), jnp.float32(0.0), lb)


# ---------------------------------------------------------------------------
# Deterministic parameter init (PyTorch-Linear-style uniform fan-in init)
# ---------------------------------------------------------------------------
def init_mine(key, obs, hidden_size):
    x_dim = obs[0] * obs[1] * obs[2]
    in_dim = 2 * x_dim
    k1, k2, k3, k4 = jax.random.split(key, 4)
    s1 = 1.0 / float(in_dim) ** 0.5
    s2 = 1.0 / float(hidden_size) ** 0.5
    return {
        "w1": jax.random.uniform(k1, (in_dim, hidden_size), jnp.float32, -s1, s1),
        "b1": jax.random.uniform(k2, (hidden_size,), jnp.float32, -s1, s1),
        "w2": jax.random.uniform(k3, (hidden_size, 1), jnp.float32, -s2, s2),
        "b2": jax.random.uniform(k4, (1,), jnp.float32, -s2, s2),
    }


if __name__ == "__main__":
    key = jax.random.PRNGKey(0)
    k_p, k_x, k_y, k_idx = jax.random.split(key, 4)

    obs = (4, 16, 16)        # x_dim = y_dim = 1024
    hidden_size = 32
    batch = 8

    params = init_mine(k_p, obs, hidden_size)
    x_samples = jax.random.normal(k_x, (batch, *obs), jnp.float32)
    y_samples = jax.random.normal(k_y, (batch, *obs), jnp.float32)

    lb = mine_forward(params, x_samples, y_samples, k_idx)
    lb = jax.block_until_ready(lb)

    # Plain-JAX f32 reference (same shuffle indices) for a sanity check.
    xf = x_samples.reshape(batch, -1)
    yf = y_samples.reshape(batch, -1)
    idx = jax.random.randint(k_idx, (batch,), 0, batch)
    ysh = yf[idx]

    def t_func(a, b):
        h = jnp.maximum(
            jnp.concatenate([a, b], axis=-1) @ params["w1"] + params["b1"], 0.0)
        return h @ params["w2"] + params["b2"]

    t0 = t_func(xf, yf)
    t1 = t_func(xf, ysh)
    ref = jnp.mean(t0) - jnp.log(jnp.mean(jnp.exp(t1)))

    assert lb.shape == (), lb.shape
    assert bool(jnp.isfinite(lb))
    assert bool(jnp.allclose(lb, ref, atol=1e-1)), (float(lb), float(ref))
    print("KERNEL_OK")
</pallas_src>

<mosaic_0001>
module attributes {stable_mosaic.version = 11 : i64} {
  func.func @_mine_kernel(%arg0: memref<8x1024xf32, #tpu.memory_space<vmem>>, %arg1: memref<8x1024xf32, #tpu.memory_space<vmem>>, %arg2: memref<8x8xf32, #tpu.memory_space<vmem>>, %arg3: memref<2048x32xf32, #tpu.memory_space<vmem>>, %arg4: memref<1x32xf32, #tpu.memory_space<vmem>>, %arg5: memref<1x32xf32, #tpu.memory_space<vmem>>, %arg6: memref<1x1xf32, #tpu.memory_space<vmem>>, %arg7: memref<1x1xf32, #tpu.memory_space<vmem>>) attributes {dimension_semantics = [], scalar_prefetch = 0 : i64, scratch_operands = 0 : i64, tpu.core_type = #tpu.core_type<tc>} {
    %c0 = arith.constant 0 : index
    %c0_0 = arith.constant 0 : index
    %0 = vector.load %arg0[%c0, %c0_0] : memref<8x1024xf32, #tpu.memory_space<vmem>>, vector<8x1024xf32>
    %1 = arith.truncf %0 : vector<8x1024xf32> to vector<8x1024xbf16>
    %c0_1 = arith.constant 0 : index
    %c0_2 = arith.constant 0 : index
    %2 = vector.load %arg1[%c0_1, %c0_2] : memref<8x1024xf32, #tpu.memory_space<vmem>>, vector<8x1024xf32>
    %3 = arith.truncf %2 : vector<8x1024xf32> to vector<8x1024xbf16>
    %c0_3 = arith.constant 0 : index
    %c0_4 = arith.constant 0 : index
    %4 = vector.load %arg3[%c0_3, %c0_4] : memref<2048x32xf32, #tpu.memory_space<vmem>>, vector<1024x32xf32>
    %5 = arith.truncf %4 : vector<1024x32xf32> to vector<1024x32xbf16>
    %c1024 = arith.constant 1024 : index
    %c0_5 = arith.constant 0 : index
    %6 = vector.load %arg3[%c1024, %c0_5] : memref<2048x32xf32, #tpu.memory_space<vmem>>, vector<1024x32xf32>
    %7 = arith.truncf %6 : vector<1024x32xf32> to vector<1024x32xbf16>
    %cst = arith.constant dense<0.000000e+00> : vector<8x32xf32>
    %8 = tpu.matmul %1, %5, %cst {dimension_numbers = #tpu.dot_dimension_numbers<[1], [0], [0], [1], [0, 0, 1, 1], [], []>} : vector<8x1024xbf16>, vector<1024x32xbf16>, vector<8x32xf32> -> vector<8x32xf32>
    %cst_6 = arith.constant dense<0.000000e+00> : vector<8x32xf32>
    %9 = tpu.matmul %3, %7, %cst_6 {dimension_numbers = #tpu.dot_dimension_numbers<[1], [0], [0], [1], [0, 0, 1, 1], [], []>} : vector<8x1024xbf16>, vector<1024x32xbf16>, vector<8x32xf32> -> vector<8x32xf32>
    %c0_7 = arith.constant 0 : index
    %c0_8 = arith.constant 0 : index
    %10 = vector.load %arg2[%c0_7, %c0_8] : memref<8x8xf32, #tpu.memory_space<vmem>>, vector<8x8xf32>
    %cst_9 = arith.constant dense<0.000000e+00> : vector<8x32xf32>
    %11 = tpu.matmul %10, %9, %cst_9 {dimension_numbers = #tpu.dot_dimension_numbers<[1], [0], [0], [1], [0, 0, 1, 1], [], []>} : vector<8x8xf32>, vector<8x32xf32>, vector<8x32xf32> -> vector<8x32xf32>
    %c0_10 = arith.constant 0 : index
    %c0_11 = arith.constant 0 : index
    %12 = vector.load %arg4[%c0_10, %c0_11] : memref<1x32xf32, #tpu.memory_space<vmem>>, vector<1x32xf32>
    %13 = arith.addf %8, %9 : vector<8x32xf32>
    %14 = vector.broadcast %12 : vector<1x32xf32> to vector<8x32xf32>
    %15 = arith.addf %13, %14 : vector<8x32xf32>
    %cst_12 = arith.constant 0.000000e+00 : f32
    %16 = vector.broadcast %cst_12 : f32 to vector<8x32xf32>
    %17 = arith.maximumf %15, %16 : vector<8x32xf32>
    %18 = arith.addf %8, %11 : vector<8x32xf32>
    %19 = vector.broadcast %12 : vector<1x32xf32> to vector<8x32xf32>
    %20 = arith.addf %18, %19 : vector<8x32xf32>
    %cst_13 = arith.constant 0.000000e+00 : f32
    %21 = vector.broadcast %cst_13 : f32 to vector<8x32xf32>
    %22 = arith.maximumf %20, %21 : vector<8x32xf32>
    %c0_14 = arith.constant 0 : index
    %c0_15 = arith.constant 0 : index
    %23 = vector.load %arg5[%c0_14, %c0_15] : memref<1x32xf32, #tpu.memory_space<vmem>>, vector<1x32xf32>
    %c0_16 = arith.constant 0 : index
    %c0_17 = arith.constant 0 : index
    %24 = vector.load %arg6[%c0_16, %c0_17] : memref<1x1xf32, #tpu.memory_space<vmem>>, vector<1x1xf32>
    %25 = vector.broadcast %23 : vector<1x32xf32> to vector<8x32xf32>
    %26 = arith.mulf %17, %25 : vector<8x32xf32>
    %cst_18 = arith.constant dense<0.000000e+00> : vector<8xf32>
    %27 = vector.multi_reduction <add>, %26, %cst_18 [1] : vector<8x32xf32> to vector<8xf32>
    %28 = vector.shape_cast %27 : vector<8xf32> to vector<8x1xf32>
    %29 = vector.broadcast %24 : vector<1x1xf32> to vector<8x1xf32>
    %30 = arith.addf %28, %29 : vector<8x1xf32>
    %31 = vector.broadcast %23 : vector<1x32xf32> to vector<8x32xf32>
    %32 = arith.mulf %22, %31 : vector<8x32xf32>
    %cst_19 = arith.constant dense<0.000000e+00> : vector<8xf32>
    %33 = vector.multi_reduction <add>, %32, %cst_19 [1] : vector<8x32xf32> to vector<8xf32>
    %34 = vector.shape_cast %33 : vector<8xf32> to vector<8x1xf32>
    %35 = vector.broadcast %24 : vector<1x1xf32> to vector<8x1xf32>
    %36 = arith.addf %34, %35 : vector<8x1xf32>
    %cst_20 = arith.constant dense<0.000000e+00> : vector<1xf32>
    %37 = vector.multi_reduction <add>, %30, %cst_20 [0] : vector<8x1xf32> to vector<1xf32>
    %38 = vector.shape_cast %37 : vector<1xf32> to vector<1x1xf32>
    %cst_21 = arith.constant 1.250000e-01 : f32
    %39 = vector.broadcast %cst_21 : f32 to vector<1x1xf32>
    %40 = arith.mulf %38, %39 : vector<1x1xf32>
    %cst_22 = arith.constant dense<0xFF800000> : vector<1xf32>
    %41 = vector.multi_reduction <maximumf>, %36, %cst_22 [0] : vector<8x1xf32> to vector<1xf32>
    %42 = vector.shape_cast %41 : vector<1xf32> to vector<1x1xf32>
    %43 = vector.broadcast %42 : vector<1x1xf32> to vector<8x1xf32>
    %44 = arith.subf %36, %43 : vector<8x1xf32>
    %45 = math.exp %44 : vector<8x1xf32>
    %cst_23 = arith.constant dense<0.000000e+00> : vector<1xf32>
    %46 = vector.multi_reduction <add>, %45, %cst_23 [0] : vector<8x1xf32> to vector<1xf32>
    %47 = vector.shape_cast %46 : vector<1xf32> to vector<1x1xf32>
    %cst_24 = arith.constant 1.250000e-01 : f32
    %48 = vector.broadcast %cst_24 : f32 to vector<1x1xf32>
    %49 = arith.mulf %47, %48 : vector<1x1xf32>
    %50 = math.log %49 : vector<1x1xf32>
    %51 = arith.addf %42, %50 : vector<1x1xf32>
    %52 = arith.subf %40, %51 : vector<1x1xf32>
    %c0_25 = arith.constant 0 : index
    %c0_26 = arith.constant 0 : index
    %53 = vector.load %arg7[%c0_25, %c0_26] : memref<1x1xf32, #tpu.memory_space<vmem>>, vector<1x1xf32>
    tpu.vector_store %arg7[%c0_25, %c0_26], %52 {strides = array<i32>} : memref<1x1xf32, #tpu.memory_space<vmem>>, vector<1x1xf32>,
    return
  }
}

</mosaic_0001>

<llo_original>
// kernel: mine_forward.1
$region0: #{mine_forward.1}
  #allocation0 [shape = 'u32[]', space=smem, size = 0x4, offset = 0x4, fixed_abs, tag = 'smem constant byte address 0x4 - core index']
  #allocation1 [shape = 'u32[72,128]{1,0:T(1,128)}', space=vmem, size = 0x9000, scoped, tag = 'internal scratch']
  #allocation2 [shape = 'f32[1,1]{1,0:T(1,128)S(1)}', space=vmem, size = 0x200, scoped, tag = 'scoped memory for mine_forward.1']
  %s0 = inlined_call_operand.vmem [shape: f32[8,1024], index: 0, kind: input, shape index: {}]
  %s1 = inlined_call_operand.vmem [shape: f32[8,1024], index: 1, kind: input, shape index: {}]
  %s2 = inlined_call_operand.vmem [shape: f32[8,8], index: 2, kind: input, shape index: {}]
  %s3 = inlined_call_operand.vmem [shape: f32[2048,32], index: 3, kind: input, shape index: {}]
  %s4 = inlined_call_operand.vmem [shape: f32[1,32], index: 4, kind: input, shape index: {}]
  %s5 = inlined_call_operand.vmem [shape: f32[1,32], index: 5, kind: input, shape index: {}]
  %s6 = inlined_call_operand.<no memory space> [shape: f32[1,1], index: 6, kind: input, shape index: {}]
  %s7 = inlined_call_operand.hbm [shape: f32[1,1], index: 7, kind: output, shape index: {}]
  %s8 = sld [smem:[#allocation0]]
  $region38: #{mine_forward.1} parent=0
    _
  %s10 = ssub.s32 1, %s8
  %s11 = scalar_select 0, %s10, %s8
  %v12 = vstv %s6
  %13 = vst [vmem:[#allocation2] sm:$0x1] %v12
  $region1: #{mine_forward.1} parent=0
    #allocation3 [shape = 'u8[512]{0}', space=vmem, size = 0x400, scoped, tag = 'output window, operand 0, single buffered']
    #allocation4 [shape = 's32[1]{0}', space=sflag, size = 0x4, scoped, tag = 'scoped memory for mine_forward.1']
    %14 = vsyncpa [#allocation4], 0
    // Predicated region
    $region2: #{mine_forward.1} parent=1 // pred_check
      _
    $region3: #{mine_forward.1} parent=1 // pred_check_branch
      %16 = sbr.rel (0) target = $region5
    $region4: #{mine_forward.1} parent=1 // pred_region
      _
    $region5: #{mine_forward.1} parent=1 // pred_fallthru
      _
    // Predicated region
    $region6: #{mine_forward.1} parent=1 // pred_check
      _
    $region7: #{mine_forward.1} parent=1 // pred_check_branch
      %18 = sbr.rel (0) target = $region9
    $region8: #{mine_forward.1} parent=1 // pred_region
      _
    $region9: #{mine_forward.1} parent=1 // pred_fallthru
      _
    // Predicated region
    $region10: #{mine_forward.1} parent=1 // pred_check
      _
    $region11: #{mine_forward.1} parent=1 // pred_check_branch
      %20 = sbr.rel (0) target = $region13
    $region12: #{mine_forward.1} parent=1 // pred_region
      _
    $region13: #{mine_forward.1} parent=1 // pred_fallthru
      _
    // Predicated region
    $region14: #{mine_forward.1} parent=1 // pred_check
      _
    $region15: #{mine_forward.1} parent=1 // pred_check_branch
      %22 = sbr.rel (0) target = $region17
    $region16: #{mine_forward.1} parent=1 // pred_region
      _
    $region17: #{mine_forward.1} parent=1 // pred_fallthru
      _
    // Predicated region
    $region18: #{mine_forward.1} parent=1 // pred_check
      _
    $region19: #{mine_forward.1} parent=1 // pred_check_branch
      %24 = sbr.rel (0) target = $region21
    $region20: #{mine_forward.1} parent=1 // pred_region
      _
    $region21: #{mine_forward.1} parent=1 // pred_fallthru
      _
    // Predicated region
    $region22: #{mine_forward.1} parent=1 // pred_check
      _
    $region23: #{mine_forward.1} parent=1 // pred_check_branch
      %26 = sbr.rel (0) target = $region25
    $region24: #{mine_forward.1} parent=1 // pred_region
      _
    $region25: #{mine_forward.1} parent=1 // pred_fallthru
      _
    // Predicated region
    $region26: #{mine_forward.1} parent=1 // pred_check
      _
    $region27: #{mine_forward.1} parent=1 // pred_check_branch
      %28 = sbr.rel (0) target = $region29
    $region28: #{mine_forward.1} parent=1 // pred_region
      _
    $region29: #{mine_forward.1} parent=1 // pred_fallthru
      _
    %v29 = vld [vmem:[%s0] sm:$0xff]
    %v30 = vld [vmem:[%s0 + $0x8] sm:$0xff]
    %v31 = vld [vmem:[%s0 + $0x10] sm:$0xff]
    %v32 = vld [vmem:[%s0 + $0x18] sm:$0xff]
    %v33 = vld [vmem:[%s0 + $0x20] sm:$0xff]
    %v34 = vld [vmem:[%s0 + $0x28] sm:$0xff]
    %v35 = vld [vmem:[%s0 + $0x30] sm:$0xff]
    %v36 = vld [vmem:[%s0 + $0x38] sm:$0xff]
    %v37 = vpack.c.bf16 %v29, %v29
    %v38 = vpack.c.bf16 %v30, %v30
    %v39 = vpack.c.bf16 %v31, %v31
    %v40 = vpack.c.bf16 %v32, %v32
    %v41 = vpack.c.bf16 %v33, %v33
    %v42 = vpack.c.bf16 %v34, %v34
    %v43 = vpack.c.bf16 %v35, %v35
    %v44 = vpack.c.bf16 %v36, %v36
    %v45 = vld [vmem:[%s1] sm:$0xff]
    %v46 = vld [vmem:[%s1 + $0x8] sm:$0xff]
    %v47 = vld [vmem:[%s1 + $0x10] sm:$0xff]
    %v48 = vld [vmem:[%s1 + $0x18] sm:$0xff]
    %v49 = vld [vmem:[%s1 + $0x20] sm:$0xff]
    %v50 = vld [vmem:[%s1 + $0x28] sm:$0xff]
    %v51 = vld [vmem:[%s1 + $0x30] sm:$0xff]
    %v52 = vld [vmem:[%s1 + $0x38] sm:$0xff]
    %v53 = vpack.c.bf16 %v45, %v45
    %v54 = vpack.c.bf16 %v46, %v46
    %v55 = vpack.c.bf16 %v47, %v47
    %v56 = vpack.c.bf16 %v48, %v48
    %v57 = vpack.c.bf16 %v49, %v49
    %v58 = vpack.c.bf16 %v50, %v50
    %v59 = vpack.c.bf16 %v51, %v51
    %v60 = vpack.c.bf16 %v52, %v52
    %v61 = vld [vmem:[%s3] sm:$0xff]
    %v62 = vld [vmem:[%s3 + $0x8] sm:$0xff]
    %v63 = vld [vmem:[%s3 + $0x10] sm:$0xff]
    %v64 = vld [vmem:[%s3 + $0x18] sm:$0xff]
    %v65 = vld [vmem:[%s3 + $0x20] sm:$0xff]
    %v66 = vld [vmem:[%s3 + $0x28] sm:$0xff]
    %v67 = vld [vmem:[%s3 + $0x30] sm:$0xff]
    %v68 = vld [vmem:[%s3 + $0x38] sm:$0xff]
    %v69 = vld [vmem:[%s3 + $0x40] sm:$0xff]
    %v70 = vld [vmem:[%s3 + $0x48] sm:$0xff]
    %v71 = vld [vmem:[%s3 + $0x50] sm:$0xff]
    %v72 = vld [vmem:[%s3 + $0x58] sm:$0xff]
    %v73 = vld [vmem:[%s3 + $0x60] sm:$0xff]
    %v74 = vld [vmem:[%s3 + $0x68] sm:$0xff]
    %v75 = vld [vmem:[%s3 + $0x70] sm:$0xff]
    %v76 = vld [vmem:[%s3 + $0x78] sm:$0xff]
    %v77 = vld [vmem:[%s3 + $0x80] sm:$0xff]
    %v78 = vld [vmem:[%s3 + $0x88] sm:$0xff]
    %v79 = vld [vmem:[%s3 + $0x90] sm:$0xff]
    %v80 = vld [vmem:[%s3 + $0x98] sm:$0xff]
    %v81 = vld [vmem:[%s3 + $0xa0] sm:$0xff]
    %v82 = vld [vmem:[%s3 + $0xa8] sm:$0xff]
    %v83 = vld [vmem:[%s3 + $0xb0] sm:$0xff]
    %v84 = vld [vmem:[%s3 + $0xb8] sm:$0xff]
    %v85 = vld [vmem:[%s3 + $0xc0] sm:$0xff]
    %v86 = vld [vmem:[%s3 + $0xc8] sm:$0xff]
    %v87 = vld [vmem:[%s3 + $0xd0] sm:$0xff]
    %v88 = vld [vmem:[%s3 + $0xd8] sm:$0xff]
    %v89 = vld [vmem:[%s3 + $0xe0] sm:$0xff]
    %v90 = vld [vmem:[%s3 + $0xe8] sm:$0xff]
    %v91 = vld [vmem:[%s3 + $0xf0] sm:$0xff]
    %v92 = vld [vmem:[%s3 + $0xf8] sm:$0xff]
    %v93 = vld [vmem:[%s3 + $0x100] sm:$0xff]
    %v94 = vld [vmem:[%s3 + $0x108] sm:$0xff]
    %v95 = vld [vmem:[%s3 + $0x110] sm:$0xff]
    %v96 = vld [vmem:[%s3 + $0x118] sm:$0xff]
    %v97 = vld [vmem:[%s3 + $0x120] sm:$0xff]
    %v98 = vld [vmem:[%s3 + $0x128] sm:$0xff]
    %v99 = vld [vmem:[%s3 + $0x130] sm:$0xff]
    %v100 = vld [vmem:[%s3 + $0x138] sm:$0xff]
    %v101 = vld [vmem:[%s3 + $0x140] sm:$0xff]
    %v102 = vld [vmem:[%s3 + $0x148] sm:$0xff]
    %v103 = vld [vmem:[%s3 + $0x150] sm:$0xff]
    %v104 = vld [vmem:[%s3 + $0x158] sm:$0xff]
    %v105 = vld [vmem:[%s3 + $0x160] sm:$0xff]
    %v106 = vld [vmem:[%s3 + $0x168] sm:$0xff]
    %v107 = vld [vmem:[%s3 + $0x170] sm:$0xff]
    %v108 = vld [vmem:[%s3 + $0x178] sm:$0xff]
    %v109 = vld [vmem:[%s3 + $0x180] sm:$0xff]
    %v110 = vld [vmem:[%s3 + $0x188] sm:$0xff]
    %v111 = vld [vmem:[%s3 + $0x190] sm:$0xff]
    %v112 = vld [vmem:[%s3 + $0x198] sm:$0xff]
    %v113 = vld [vmem:[%s3 + $0x1a0] sm:$0xff]
    %v114 = vld [vmem:[%s3 + $0x1a8] sm:$0xff]
    %v115 = vld [vmem:[%s3 + $0x1b0] sm:$0xff]
    %v116 = vld [vmem:[%s3 + $0x1b8] sm:$0xff]
    %v117 = vld [vmem:[%s3 + $0x1c0] sm:$0xff]
    %v118 = vld [vmem:[%s3 + $0x1c8] sm:$0xff]
    %v119 = vld [vmem:[%s3 + $0x1d0] sm:$0xff]
    %v120 = vld [vmem:[%s3 + $0x1d8] sm:$0xff]
    %v121 = vld [vmem:[%s3 + $0x1e0] sm:$0xff]
    %v122 = vld [vmem:[%s3 + $0x1e8] sm:$0xff]
    %v123 = vld [vmem:[%s3 + $0x1f0] sm:$0xff]
    %v124 = vld [vmem:[%s3 + $0x1f8] sm:$0xff]
    %v125 = vld [vmem:[%s3 + $0x200] sm:$0xff]
    %v126 = vld [vmem:[%s3 + $0x208] sm:$0xff]
    %v127 = vld [vmem:[%s3 + $0x210] sm:$0xff]
    %v128 = vld [vmem:[%s3 + $0x218] sm:$0xff]
    %v129 = vld [vmem:[%s3 + $0x220] sm:$0xff]
    %v130 = vld [vmem:[%s3 + $0x228] sm:$0xff]
    %v131 = vld [vmem:[%s3 + $0x230] sm:$0xff]
    %v132 = vld [vmem:[%s3 + $0x238] sm:$0xff]
    %v133 = vld [vmem:[%s3 + $0x240] sm:$0xff]
    %v134 = vld [vmem:[%s3 + $0x248] sm:$0xff]
    %v135 = vld [vmem:[%s3 + $0x250] sm:$0xff]
    %v136 = vld [vmem:[%s3 + $0x258] sm:$0xff]
    %v137 = vld [vmem:[%s3 + $0x260] sm:$0xff]
    %v138 = vld [vmem:[%s3 + $0x268] sm:$0xff]
    %v139 = vld [vmem:[%s3 + $0x270] sm:$0xff]
    %v140 = vld [vmem:[%s3 + $0x278] sm:$0xff]
    %v141 = vld [vmem:[%s3 + $0x280] sm:$0xff]
    %v142 = vld [vmem:[%s3 + $0x288] sm:$0xff]
    %v143 = vld [vmem:[%s3 + $0x290] sm:$0xff]
    %v144 = vld [vmem:[%s3 + $0x298] sm:$0xff]
    %v145 = vld [vmem:[%s3 + $0x2a0] sm:$0xff]
    %v146 = vld [vmem:[%s3 + $0x2a8] sm:$0xff]
    %v147 = vld [vmem:[%s3 + $0x2b0] sm:$0xff]
    %v148 = vld [vmem:[%s3 + $0x2b8] sm:$0xff]
    %v149 = vld [vmem:[%s3 + $0x2c0] sm:$0xff]
    %v150 = vld [vmem:[%s3 + $0x2c8] sm:$0xff]
    %v151 = vld [vmem:[%s3 + $0x2d0] sm:$0xff]
    %v152 = vld [vmem:[%s3 + $0x2d8] sm:$0xff]
    %v153 = vld [vmem:[%s3 + $0x2e0] sm:$0xff]
    %v154 = vld [vmem:[%s3 + $0x2e8] sm:$0xff]
    %v155 = vld [vmem:[%s3 + $0x2f0] sm:$0xff]
    %v156 = vld [vmem:[%s3 + $0x2f8] sm:$0xff]
    %v157 = vld [vmem:[%s3 + $0x300] sm:$0xff]
    %v158 = vld [vmem:[%s3 + $0x308] sm:$0xff]
    %v159 = vld [vmem:[%s3 + $0x310] sm:$0xff]
    %v160 = vld [vmem:[%s3 + $0x318] sm:$0xff]
    %v161 = vld [vmem:[%s3 + $0x320] sm:$0xff]
    %v162 = vld [vmem:[%s3 + $0x328] sm:$0xff]
    %v163 = vld [vmem:[%s3 + $0x330] sm:$0xff]
    %v164 = vld [vmem:[%s3 + $0x338] sm:$0xff]
    %v165 = vld [vmem:[%s3 + $0x340] sm:$0xff]
    %v166 = vld [vmem:[%s3 + $0x348] sm:$0xff]
    %v167 = vld [vmem:[%s3 + $0x350] sm:$0xff]
    %v168 = vld [vmem:[%s3 + $0x358] sm:$0xff]
    %v169 = vld [vmem:[%s3 + $0x360] sm:$0xff]
    %v170 = vld [vmem:[%s3 + $0x368] sm:$0xff]
    %v171 = vld [vmem:[%s3 + $0x370] sm:$0xff]
    %v172 = vld [vmem:[%s3 + $0x378] sm:$0xff]
    %v173 = vld [vmem:[%s3 + $0x380] sm:$0xff]
    %v174 = vld [vmem:[%s3 + $0x388] sm:$0xff]
    %v175 = vld [vmem:[%s3 + $0x390] sm:$0xff]
    %v176 = vld [vmem:[%s3 + $0x398] sm:$0xff]
    %v177 = vld [vmem:[%s3 + $0x3a0] sm:$0xff]
    %v178 = vld [vmem:[%s3 + $0x3a8] sm:$0xff]
    %v179 = vld [vmem:[%s3 + $0x3b0] sm:$0xff]
    %v180 = vld [vmem:[%s3 + $0x3b8] sm:$0xff]
    %v181 = vld [vmem:[%s3 + $0x3c0] sm:$0xff]
    %v182 = vld [vmem:[%s3 + $0x3c8] sm:$0xff]
    %v183 = vld [vmem:[%s3 + $0x3d0] sm:$0xff]
    %v184 = vld [vmem:[%s3 + $0x3d8] sm:$0xff]
    %v185 = vld [vmem:[%s3 + $0x3e0] sm:$0xff]
    %v186 = vld [vmem:[%s3 + $0x3e8] sm:$0xff]
    %v187 = vld [vmem:[%s3 + $0x3f0] sm:$0xff]
    %v188 = vld [vmem:[%s3 + $0x3f8] sm:$0xff]
    %v189 = vpack.c.bf16 %v62, %v61
    %v190 = vpack.c.bf16 %v64, %v63
    %v191 = vpack.c.bf16 %v66, %v65
    %v192 = vpack.c.bf16 %v68, %v67
    %v193 = vpack.c.bf16 %v70, %v69
    %v194 = vpack.c.bf16 %v72, %v71
    %v195 = vpack.c.bf16 %v74, %v73
    %v196 = vpack.c.bf16 %v76, %v75
    %v197 = vpack.c.bf16 %v78, %v77
    %v198 = vpack.c.bf16 %v80, %v79
    %v199 = vpack.c.bf16 %v82, %v81
    %v200 = vpack.c.bf16 %v84, %v83
    %v201 = vpack.c.bf16 %v86, %v85
    %v202 = vpack.c.bf16 %v88, %v87
    %v203 = vpack.c.bf16 %v90, %v89
    %v204 = vpack.c.bf16 %v92, %v91
    %v205 = vpack.c.bf16 %v94, %v93
    %v206 = vpack.c.bf16 %v96, %v95
    %v207 = vpack.c.bf16 %v98, %v97
    %v208 = vpack.c.bf16 %v100, %v99
    %v209 = vpack.c.bf16 %v102, %v101
    %v210 = vpack.c.bf16 %v104, %v103
    %v211 = vpack.c.bf16 %v106, %v105
    %v212 = vpack.c.bf16 %v108, %v107
    %v213 = vpack.c.bf16 %v110, %v109
    %v214 = vpack.c.bf16 %v112, %v111
    %v215 = vpack.c.bf16 %v114, %v113
    %v216 = vpack.c.bf16 %v116, %v115
    %v217 = vpack.c.bf16 %v118, %v117
    %v218 = vpack.c.bf16 %v120, %v119
    %v219 = vpack.c.bf16 %v122, %v121
    %v220 = vpack.c.bf16 %v124, %v123
    %v221 = vpack.c.bf16 %v126, %v125
    %v222 = vpack.c.bf16 %v128, %v127
    %v223 = vpack.c.bf16 %v130, %v129
    %v224 = vpack.c.bf16 %v132, %v131
    %v225 = vpack.c.bf16 %v134, %v133
    %v226 = vpack.c.bf16 %v136, %v135
    %v227 = vpack.c.bf16 %v138, %v137
    %v228 = vpack.c.bf16 %v140, %v139
    %v229 = vpack.c.bf16 %v142, %v141
    %v230 = vpack.c.bf16 %v144, %v143
    %v231 = vpack.c.bf16 %v146, %v145
    %v232 = vpack.c.bf16 %v148, %v147
    %v233 = vpack.c.bf16 %v150, %v149
    %v234 = vpack.c.bf16 %v152, %v151
    %v235 = vpack.c.bf16 %v154, %v153
    %v236 = vpack.c.bf16 %v156, %v155
    %v237 = vpack.c.bf16 %v158, %v157
    %v238 = vpack.c.bf16 %v160, %v159
    %v239 = vpack.c.bf16 %v162, %v161
    %v240 = vpack.c.bf16 %v164, %v163
    %v241 = vpack.c.bf16 %v166, %v165
    %v242 = vpack.c.bf16 %v168, %v167
    %v243 = vpack.c.bf16 %v170, %v169
    %v244 = vpack.c.bf16 %v172, %v171
    %v245 = vpack.c.bf16 %v174, %v173
    %v246 = vpack.c.bf16 %v176, %v175
    %v247 = vpack.c.bf16 %v178, %v177
    %v248 = vpack.c.bf16 %v180, %v179
    %v249 = vpack.c.bf16 %v182, %v181
    %v250 = vpack.c.bf16 %v184, %v183
    %v251 = vpack.c.bf16 %v186, %v185
    %v252 = vpack.c.bf16 %v188, %v187
    %v253 = vld [vmem:[%s3 + $0x400] sm:$0xff]
    %v254 = vld [vmem:[%s3 + $0x408] sm:$0xff]
    %v255 = vld [vmem:[%s3 + $0x410] sm:$0xff]
    %v256 = vld [vmem:[%s3 + $0x418] sm:$0xff]
    %v257 = vld [vmem:[%s3 + $0x420] sm:$0xff]
    %v258 = vld [vmem:[%s3 + $0x428] sm:$0xff]
    %v259 = vld [vmem:[%s3 + $0x430] sm:$0xff]
    %v260 = vld [vmem:[%s3 + $0x438] sm:$0xff]
    %v261 = vld [vmem:[%s3 + $0x440] sm:$0xff]
    %v262 = vld [vmem:[%s3 + $0x448] sm:$0xff]
    %v263 = vld [vmem:[%s3 + $0x450] sm:$0xff]
    %v264 = vld [vmem:[%s3 + $0x458] sm:$0xff]
    %v265 = vld [vmem:[%s3 + $0x460] sm:$0xff]
    %v266 = vld [vmem:[%s3 + $0x468] sm:$0xff]
    %v267 = vld [vmem:[%s3 + $0x470] sm:$0xff]
    %v268 = vld [vmem:[%s3 + $0x478] sm:$0xff]
    %v269 = vld [vmem:[%s3 + $0x480] sm:$0xff]
    %v270 = vld [vmem:[%s3 + $0x488] sm:$0xff]
    %v271 = vld [vmem:[%s3 + $0x490] sm:$0xff]
    %v272 = vld [vmem:[%s3 + $0x498] sm:$0xff]
    %v273 = vld [vmem:[%s3 + $0x4a0] sm:$0xff]
    %v274 = vld [vmem:[%s3 + $0x4a8] sm:$0xff]
    %v275 = vld [vmem:[%s3 + $0x4b0] sm:$0xff]
    %v276 = vld [vmem:[%s3 + $0x4b8] sm:$0xff]
    %v277 = vld [vmem:[%s3 + $0x4c0] sm:$0xff]
    %v278 = vld [vmem:[%s3 + $0x4c8] sm:$0xff]
    %v279 = vld [vmem:[%s3 + $0x4d0] sm:$0xff]
    %v280 = vld [vmem:[%s3 + $0x4d8] sm:$0xff]
    %v281 = vld [vmem:[%s3 + $0x4e0] sm:$0xff]
    %v282 = vld [vmem:[%s3 + $0x4e8] sm:$0xff]
    %v283 = vld [vmem:[%s3 + $0x4f0] sm:$0xff]
    %v284 = vld [vmem:[%s3 + $0x4f8] sm:$0xff]
    %v285 = vld [vmem:[%s3 + $0x500] sm:$0xff]
    %v286 = vld [vmem:[%s3 + $0x508] sm:$0xff]
    %v287 = vld [vmem:[%s3 + $0x510] sm:$0xff]
    %v288 = vld [vmem:[%s3 + $0x518] sm:$0xff]
    %v289 = vld [vmem:[%s3 + $0x520] sm:$0xff]
    %v290 = vld [vmem:[%s3 + $0x528] sm:$0xff]
    %v291 = vld [vmem:[%s3 + $0x530] sm:$0xff]
    %v292 = vld [vmem:[%s3 + $0x538] sm:$0xff]
    %v293 = vld [vmem:[%s3 + $0x540] sm:$0xff]
    %v294 = vld [vmem:[%s3 + $0x548] sm:$0xff]
    %v295 = vld [vmem:[%s3 + $0x550] sm:$0xff]
    %v296 = vld [vmem:[%s3 + $0x558] sm:$0xff]
    %v297 = vld [vmem:[%s3 + $0x560] sm:$0xff]
    %v298 = vld [vmem:[%s3 + $0x568] sm:$0xff]
    %v299 = vld [vmem:[%s3 + $0x570] sm:$0xff]
    %v300 = vld [vmem:[%s3 + $0x578] sm:$0xff]
    %v301 = vld [vmem:[%s3 + $0x580] sm:$0xff]
    %v302 = vld [vmem:[%s3 + $0x588] sm:$0xff]
    %v303 = vld [vmem:[%s3 + $0x590] sm:$0xff]
    %v304 = vld [vmem:[%s3 + $0x598] sm:$0xff]
    %v305 = vld [vmem:[%s3 + $0x5a0] sm:$0xff]
    %v306 = vld [vmem:[%s3 + $0x5a8] sm:$0xff]
    %v307 = vld [vmem:[%s3 + $0x5b0] sm:$0xff]
    %v308 = vld [vmem:[%s3 + $0x5b8] sm:$0xff]
    %v309 = vld [vmem:[%s3 + $0x5c0] sm:$0xff]
    %v310 = vld [vmem:[%s3 + $0x5c8] sm:$0xff]
    %v311 = vld [vmem:[%s3 + $0x5d0] sm:$0xff]
    %v312 = vld [vmem:[%s3 + $0x5d8] sm:$0xff]
    %v313 = vld [vmem:[%s3 + $0x5e0] sm:$0xff]
    %v314 = vld [vmem:[%s3 + $0x5e8] sm:$0xff]
    %v315 = vld [vmem:[%s3 + $0x5f0] sm:$0xff]
    %v316 = vld [vmem:[%s3 + $0x5f8] sm:$0xff]
    %v317 = vld [vmem:[%s3 + $0x600] sm:$0xff]
    %v318 = vld [vmem:[%s3 + $0x608] sm:$0xff]
    %v319 = vld [vmem:[%s3 + $0x610] sm:$0xff]
    %v320 = vld [vmem:[%s3 + $0x618] sm:$0xff]
    %v321 = vld [vmem:[%s3 + $0x620] sm:$0xff]
    %v322 = vld [vmem:[%s3 + $0x628] sm:$0xff]
    %v323 = vld [vmem:[%s3 + $0x630] sm:$0xff]
    %v324 = vld [vmem:[%s3 + $0x638] sm:$0xff]
    %v325 = vld [vmem:[%s3 + $0x640] sm:$0xff]
    %v326 = vld [vmem:[%s3 + $0x648] sm:$0xff]
    %v327 = vld [vmem:[%s3 + $0x650] sm:$0xff]
    %v328 = vld [vmem:[%s3 + $0x658] sm:$0xff]
    %v329 = vld [vmem:[%s3 + $0x660] sm:$0xff]
    %v330 = vld [vmem:[%s3 + $0x668] sm:$0xff]
    %v331 = vld [vmem:[%s3 + $0x670] sm:$0xff]
    %v332 = vld [vmem:[%s3 + $0x678] sm:$0xff]
    %v333 = vld [vmem:[%s3 + $0x680] sm:$0xff]
    %v334 = vld [vmem:[%s3 + $0x688] sm:$0xff]
    %v335 = vld [vmem:[%s3 + $0x690] sm:$0xff]
    %v336 = vld [vmem:[%s3 + $0x698] sm:$0xff]
    %v337 = vld [vmem:[%s3 + $0x6a0] sm:$0xff]
    %v338 = vld [vmem:[%s3 + $0x6a8] sm:$0xff]
    %v339 = vld [vmem:[%s3 + $0x6b0] sm:$0xff]
    %v340 = vld [vmem:[%s3 + $0x6b8] sm:$0xff]
    %v341 = vld [vmem:[%s3 + $0x6c0] sm:$0xff]
    %v342 = vld [vmem:[%s3 + $0x6c8] sm:$0xff]
    %v343 = vld [vmem:[%s3 + $0x6d0] sm:$0xff]
    %v344 = vld [vmem:[%s3 + $0x6d8] sm:$0xff]
    %v345 = vld [vmem:[%s3 + $0x6e0] sm:$0xff]
    %v346 = vld [vmem:[%s3 + $0x6e8] sm:$0xff]
    %v347 = vld [vmem:[%s3 + $0x6f0] sm:$0xff]
    %v348 = vld [vmem:[%s3 + $0x6f8] sm:$0xff]
    %v349 = vld [vmem:[%s3 + $0x700] sm:$0xff]
    %v350 = vld [vmem:[%s3 + $0x708] sm:$0xff]
    %v351 = vld [vmem:[%s3 + $0x710] sm:$0xff]
    %v352 = vld [vmem:[%s3 + $0x718] sm:$0xff]
    %v353 = vld [vmem:[%s3 + $0x720] sm:$0xff]
    %v354 = vld [vmem:[%s3 + $0x728] sm:$0xff]
    %v355 = vld [vmem:[%s3 + $0x730] sm:$0xff]
    %v356 = vld [vmem:[%s3 + $0x738] sm:$0xff]
    %v357 = vld [vmem:[%s3 + $0x740] sm:$0xff]
    %v358 = vld [vmem:[%s3 + $0x748] sm:$0xff]
    %v359 = vld [vmem:[%s3 + $0x750] sm:$0xff]
    %v360 = vld [vmem:[%s3 + $0x758] sm:$0xff]
    %v361 = vld [vmem:[%s3 + $0x760] sm:$0xff]
    %v362 = vld [vmem:[%s3 + $0x768] sm:$0xff]
    %v363 = vld [vmem:[%s3 + $0x770] sm:$0xff]
    %v364 = vld [vmem:[%s3 + $0x778] sm:$0xff]
    %v365 = vld [vmem:[%s3 + $0x780] sm:$0xff]
    %v366 = vld [vmem:[%s3 + $0x788] sm:$0xff]
    %v367 = vld [vmem:[%s3 + $0x790] sm:$0xff]
    %v368 = vld [vmem:[%s3 + $0x798] sm:$0xff]
    %v369 = vld [vmem:[%s3 + $0x7a0] sm:$0xff]
    %v370 = vld [vmem:[%s3 + $0x7a8] sm:$0xff]
    %v371 = vld [vmem:[%s3 + $0x7b0] sm:$0xff]
    %v372 = vld [vmem:[%s3 + $0x7b8] sm:$0xff]
    %v373 = vld [vmem:[%s3 + $0x7c0] sm:$0xff]
    %v374 = vld [vmem:[%s3 + $0x7c8] sm:$0xff]
    %v375 = vld [vmem:[%s3 + $0x7d0] sm:$0xff]
    %v376 = vld [vmem:[%s3 + $0x7d8] sm:$0xff]
    %v377 = vld [vmem:[%s3 + $0x7e0] sm:$0xff]
    %v378 = vld [vmem:[%s3 + $0x7e8] sm:$0xff]
    %v379 = vld [vmem:[%s3 + $0x7f0] sm:$0xff]
    %v380 = vld [vmem:[%s3 + $0x7f8] sm:$0xff]
    %v381 = vpack.c.bf16 %v254, %v253
    %v382 = vpack.c.bf16 %v256, %v255
    %v383 = vpack.c.bf16 %v258, %v257
    %v384 = vpack.c.bf16 %v260, %v259
    %v385 = vpack.c.bf16 %v262, %v261
    %v386 = vpack.c.bf16 %v264, %v263
    %v387 = vpack.c.bf16 %v266, %v265
    %v388 = vpack.c.bf16 %v268, %v267
    %v389 = vpack.c.bf16 %v270, %v269
    %v390 = vpack.c.bf16 %v272, %v271
    %v391 = vpack.c.bf16 %v274, %v273
    %v392 = vpack.c.bf16 %v276, %v275
    %v393 = vpack.c.bf16 %v278, %v277
    %v394 = vpack.c.bf16 %v280, %v279
    %v395 = vpack.c.bf16 %v282, %v281
    %v396 = vpack.c.bf16 %v284, %v283
    %v397 = vpack.c.bf16 %v286, %v285
    %v398 = vpack.c.bf16 %v288, %v287
    %v399 = vpack.c.bf16 %v290, %v289
    %v400 = vpack.c.bf16 %v292, %v291
    %v401 = vpack.c.bf16 %v294, %v293
    %v402 = vpack.c.bf16 %v296, %v295
    %v403 = vpack.c.bf16 %v298, %v297
    %v404 = vpack.c.bf16 %v300, %v299
    %v405 = vpack.c.bf16 %v302, %v301
    %v406 = vpack.c.bf16 %v304, %v303
    %v407 = vpack.c.bf16 %v306, %v305
    %v408 = vpack.c.bf16 %v308, %v307
    %v409 = vpack.c.bf16 %v310, %v309
    %v410 = vpack.c.bf16 %v312, %v311
    %v411 = vpack.c.bf16 %v314, %v313
    %v412 = vpack.c.bf16 %v316, %v315
    %v413 = vpack.c.bf16 %v318, %v317
    %v414 = vpack.c.bf16 %v320, %v319
    %v415 = vpack.c.bf16 %v322, %v321
    %v416 = vpack.c.bf16 %v324, %v323
    %v417 = vpack.c.bf16 %v326, %v325
    %v418 = vpack.c.bf16 %v328, %v327
    %v419 = vpack.c.bf16 %v330, %v329
    %v420 = vpack.c.bf16 %v332, %v331
    %v421 = vpack.c.bf16 %v334, %v333
    %v422 = vpack.c.bf16 %v336, %v335
    %v423 = vpack.c.bf16 %v338, %v337
    %v424 = vpack.c.bf16 %v340, %v339
    %v425 = vpack.c.bf16 %v342, %v341
    %v426 = vpack.c.bf16 %v344, %v343
    %v427 = vpack.c.bf16 %v346, %v345
    %v428 = vpack.c.bf16 %v348, %v347
    %v429 = vpack.c.bf16 %v350, %v349
    %v430 = vpack.c.bf16 %v352, %v351
    %v431 = vpack.c.bf16 %v354, %v353
    %v432 = vpack.c.bf16 %v356, %v355
    %v433 = vpack.c.bf16 %v358, %v357
    %v434 = vpack.c.bf16 %v360, %v359
    %v435 = vpack.c.bf16 %v362, %v361
    %v436 = vpack.c.bf16 %v364, %v363
    %v437 = vpack.c.bf16 %v366, %v365
    %v438 = vpack.c.bf16 %v368, %v367
    %v439 = vpack.c.bf16 %v370, %v369
    %v440 = vpack.c.bf16 %v372, %v371
    %v441 = vpack.c.bf16 %v374, %v373
    %v442 = vpack.c.bf16 %v376, %v375
    %v443 = vpack.c.bf16 %v378, %v377
    %v444 = vpack.c.bf16 %v380, %v379
    %445 = vmatpush.bf16.msra.mxu0 %v196
    %446 = vmatpush.bf16.msra.mxu0 %v195
    %447 = vmatpush.bf16.msra.mxu0 %v194
    %448 = vmatpush.bf16.msra.mxu0 %v193
    %449 = vmatpush.bf16.msra.mxu0 %v192
    %450 = vmatpush.bf16.msra.mxu0 %v191
    %451 = vmatpush.bf16.msra.mxu0 %v190
    %452 = vmatpush.bf16.msra.mxu0 %v189
    %453 = vmatmul.bf16.gmra.mxu0 %v37
    %v454 = vpop.f32.mrf.mxu0
    %v455 = vadd.f32 0.0, %v454
    %v456 = vpop.f32.mrf.mxu0
    %457 = vdwg.mxu0
    %458 = vmatpush.bf16.msra.mxu0 %v204
    %459 = vmatpush.bf16.msra.mxu0 %v203
    %460 = vmatpush.bf16.msra.mxu0 %v202
    %461 = vmatpush.bf16.msra.mxu0 %v201
    %462 = vmatpush.bf16.msra.mxu0 %v200
    %463 = vmatpush.bf16.msra.mxu0 %v199
    %464 = vmatpush.bf16.msra.mxu0 %v198
    %465 = vmatpush.bf16.msra.mxu0 %v197
    %466 = vmatmul.bf16.gmra.mxu0 %v38
    %v467 = vpop.f32.mrf.mxu0
    %v468 = vadd.f32 %v455, %v467
    %v469 = vpop.f32.mrf.mxu0
    %470 = vdwg.mxu0
    %471 = vmatpush.bf16.msra.mxu0 %v212
    %472 = vmatpush.bf16.msra.mxu0 %v211
    %473 = vmatpush.bf16.msra.mxu0 %v210
    %474 = vmatpush.bf16.msra.mxu0 %v209
    %475 = vmatpush.bf16.msra.mxu0 %v208
    %476 = vmatpush.bf16.msra.mxu0 %v207
    %477 = vmatpush.bf16.msra.mxu0 %v206
    %478 = vmatpush.bf16.msra.mxu0 %v205
    %479 = vmatmul.bf16.gmra.mxu0 %v39
    %v480 = vpop.f32.mrf.mxu0
    %v481 = vadd.f32 %v468, %v480
    %v482 = vpop.f32.mrf.mxu0
    %483 = vdwg.mxu0
    %484 = vmatpush.bf16.msra.mxu0 %v220
    %485 = vmatpush.bf16.msra.mxu0 %v219
    %486 = vmatpush.bf16.msra.mxu0 %v218
    %487 = vmatpush.bf16.msra.mxu0 %v217
    %488 = vmatpush.bf16.msra.mxu0 %v216
    %489 = vmatpush.bf16.msra.mxu0 %v215
    %490 = vmatpush.bf16.msra.mxu0 %v214
    %491 = vmatpush.bf16.msra.mxu0 %v213
    %492 = vmatmul.bf16.gmra.mxu0 %v40
    %v493 = vpop.f32.mrf.mxu0
    %v494 = vadd.f32 %v481, %v493
    %v495 = vpop.f32.mrf.mxu0
    %496 = vdwg.mxu0
    %497 = vmatpush.bf16.msra.mxu0 %v228
    %498 = vmatpush.bf16.msra.mxu0 %v227
    %499 = vmatpush.bf16.msra.mxu0 %v226
    %500 = vmatpush.bf16.msra.mxu0 %v225
    %501 = vmatpush.bf16.msra.mxu0 %v224
    %502 = vmatpush.bf16.msra.mxu0 %v223
    %503 = vmatpush.bf16.msra.mxu0 %v222
    %504 = vmatpush.bf16.msra.mxu0 %v221
    %505 = vmatmul.bf16.gmra.mxu0 %v41
    %v506 = vpop.f32.mrf.mxu0
    %v507 = vadd.f32 %v494, %v506
    %v508 = vpop.f32.mrf.mxu0
    %509 = vdwg.mxu0
    %510 = vmatpush.bf16.msra.mxu0 %v236
    %511 = vmatpush.bf16.msra.mxu0 %v235
    %512 = vmatpush.bf16.msra.mxu0 %v234
    %513 = vmatpush.bf16.msra.mxu0 %v233
    %514 = vmatpush.bf16.msra.mxu0 %v232
    %515 = vmatpush.bf16.msra.mxu0 %v231
    %516 = vmatpush.bf16.msra.mxu0 %v230
    %517 = vmatpush.bf16.msra.mxu0 %v229
    %518 = vmatmul.bf16.gmra.mxu0 %v42
    %v519 = vpop.f32.mrf.mxu0
    %v520 = vadd.f32 %v507, %v519
    %v521 = vpop.f32.mrf.mxu0
    %522 = vdwg.mxu0
    %523 = vmatpush.bf16.msra.mxu0 %v244
    %524 = vmatpush.bf16.msra.mxu0 %v243
    %525 = vmatpush.bf16.msra.mxu0 %v242
    %526 = vmatpush.bf16.msra.mxu0 %v241
    %527 = vmatpush.bf16.msra.mxu0 %v240
    %528 = vmatpush.bf16.msra.mxu0 %v239
    %529 = vmatpush.bf16.msra.mxu0 %v238
    %530 = vmatpush.bf16.msra.mxu0 %v237
    %531 = vmatmul.bf16.gmra.mxu0 %v43
    %v532 = vpop.f32.mrf.mxu0
    %v533 = vadd.f32 %v520, %v532
    %v534 = vpop.f32.mrf.mxu0
    %535 = vdwg.mxu0
    %536 = vmatpush.bf16.msra.mxu0 %v252
    %537 = vmatpush.bf16.msra.mxu0 %v251
    %538 = vmatpush.bf16.msra.mxu0 %v250
    %539 = vmatpush.bf16.msra.mxu0 %v249
    %540 = vmatpush.bf16.msra.mxu0 %v248
    %541 = vmatpush.bf16.msra.mxu0 %v247
    %542 = vmatpush.bf16.msra.mxu0 %v246
    %543 = vmatpush.bf16.msra.mxu0 %v245
    %544 = vmatmul.bf16.gmra.mxu0 %v44
    %v545 = vpop.f32.mrf.mxu0
    %v546 = vadd.f32 %v533, %v545
    %v547 = vpop.f32.mrf.mxu0
    %548 = vdwg.mxu0
    %549 = vmatpush.bf16.msra.mxu0 %v388
    %550 = vmatpush.bf16.msra.mxu0 %v387
    %551 = vmatpush.bf16.msra.mxu0 %v386
    %552 = vmatpush.bf16.msra.mxu0 %v385
    %553 = vmatpush.bf16.msra.mxu0 %v384
    %554 = vmatpush.bf16.msra.mxu0 %v383
    %555 = vmatpush.bf16.msra.mxu0 %v382
    %556 = vmatpush.bf16.msra.mxu0 %v381
    %557 = vmatmul.bf16.gmra.mxu0 %v53
    %v558 = vpop.f32.mrf.mxu0
    %v559 = vadd.f32 0.0, %v558
    %v560 = vpop.f32.mrf.mxu0
    %561 = vdwg.mxu0
    %562 = vmatpush.bf16.msra.mxu0 %v396
    %563 = vmatpush.bf16.msra.mxu0 %v395
    %564 = vmatpush.bf16.msra.mxu0 %v394
    %565 = vmatpush.bf16.msra.mxu0 %v393
    %566 = vmatpush.bf16.msra.mxu0 %v392
    %567 = vmatpush.bf16.msra.mxu0 %v391
    %568 = vmatpush.bf16.msra.mxu0 %v390
    %569 = vmatpush.bf16.msra.mxu0 %v389
    %570 = vmatmul.bf16.gmra.mxu0 %v54
    %v571 = vpop.f32.mrf.mxu0
    %v572 = vadd.f32 %v559, %v571
    %v573 = vpop.f32.mrf.mxu0
    %574 = vdwg.mxu0
    %575 = vmatpush.bf16.msra.mxu0 %v404
    %576 = vmatpush.bf16.msra.mxu0 %v403
    %577 = vmatpush.bf16.msra.mxu0 %v402
    %578 = vmatpush.bf16.msra.mxu0 %v401
    %579 = vmatpush.bf16.msra.mxu0 %v400
    %580 = vmatpush.bf16.msra.mxu0 %v399
    %581 = vmatpush.bf16.msra.mxu0 %v398
    %582 = vmatpush.bf16.msra.mxu0 %v397
    %583 = vmatmul.bf16.gmra.mxu0 %v55
    %v584 = vpop.f32.mrf.mxu0
    %v585 = vadd.f32 %v572, %v584
    %v586 = vpop.f32.mrf.mxu0
    %587 = vdwg.mxu0
    %588 = vmatpush.bf16.msra.mxu0 %v412
    %589 = vmatpush.bf16.msra.mxu0 %v411
    %590 = vmatpush.bf16.msra.mxu0 %v410
    %591 = vmatpush.bf16.msra.mxu0 %v409
    %592 = vmatpush.bf16.msra.mxu0 %v408
    %593 = vmatpush.bf16.msra.mxu0 %v407
    %594 = vmatpush.bf16.msra.mxu0 %v406
    %595 = vmatpush.bf16.msra.mxu0 %v405
    %596 = vmatmul.bf16.gmra.mxu0 %v56
    %v597 = vpop.f32.mrf.mxu0
    %v598 = vadd.f32 %v585, %v597
    %v599 = vpop.f32.mrf.mxu0
    %600 = vdwg.mxu0
    %601 = vmatpush.bf16.msra.mxu0 %v420
    %602 = vmatpush.bf16.msra.mxu0 %v419
    %603 = vmatpush.bf16.msra.mxu0 %v418
    %604 = vmatpush.bf16.msra.mxu0 %v417
    %605 = vmatpush.bf16.msra.mxu0 %v416
    %606 = vmatpush.bf16.msra.mxu0 %v415
    %607 = vmatpush.bf16.msra.mxu0 %v414
    %608 = vmatpush.bf16.msra.mxu0 %v413
    %609 = vmatmul.bf16.gmra.mxu0 %v57
    %v610 = vpop.f32.mrf.mxu0
    %v611 = vadd.f32 %v598, %v610
    %v612 = vpop.f32.mrf.mxu0
    %613 = vdwg.mxu0
    %614 = vmatpush.bf16.msra.mxu0 %v428
    %615 = vmatpush.bf16.msra.mxu0 %v427
    %616 = vmatpush.bf16.msra.mxu0 %v426
    %617 = vmatpush.bf16.msra.mxu0 %v425
    %618 = vmatpush.bf16.msra.mxu0 %v424
    %619 = vmatpush.bf16.msra.mxu0 %v423
    %620 = vmatpush.bf16.msra.mxu0 %v422
    %621 = vmatpush.bf16.msra.mxu0 %v421
    %622 = vmatmul.bf16.gmra.mxu0 %v58
    %v623 = vpop.f32.mrf.mxu0
    %v624 = vadd.f32 %v611, %v623
    %v625 = vpop.f32.mrf.mxu0
    %626 = vdwg.mxu0
    %627 = vmatpush.bf16.msra.mxu0 %v436
    %628 = vmatpush.bf16.msra.mxu0 %v435
    %629 = vmatpush.bf16.msra.mxu0 %v434
    %630 = vmatpush.bf16.msra.mxu0 %v433
    %631 = vmatpush.bf16.msra.mxu0 %v432
    %632 = vmatpush.bf16.msra.mxu0 %v431
    %633 = vmatpush.bf16.msra.mxu0 %v430
    %634 = vmatpush.bf16.msra.mxu0 %v429
    %635 = vmatmul.bf16.gmra.mxu0 %v59
    %v636 = vpop.f32.mrf.mxu0
    %v637 = vadd.f32 %v624, %v636
    %v638 = vpop.f32.mrf.mxu0
    %639 = vdwg.mxu0
    %640 = vmatpush.bf16.msra.mxu0 %v444
    %641 = vmatpush.bf16.msra.mxu0 %v443
    %642 = vmatpush.bf16.msra.mxu0 %v442
    %643 = vmatpush.bf16.msra.mxu0 %v441
    %644 = vmatpush.bf16.msra.mxu0 %v440
    %645 = vmatpush.bf16.msra.mxu0 %v439
    %646 = vmatpush.bf16.msra.mxu0 %v438
    %647 = vmatpush.bf16.msra.mxu0 %v437
    %648 = vmatmul.bf16.gmra.mxu0 %v60
    %v649 = vpop.f32.mrf.mxu0
    %v650 = vadd.f32 %v637, %v649
    %v651 = vpop.f32.mrf.mxu0
    %652 = vdwg.mxu0
    %v653 = vld [vmem:[%s2] sm:$0xff]
    %vm654 = vcmask 64512
    %v656 = vsel %vm654, %v653, 0
    %658 = vmatpush.msra.mxu0 0.0
    %659 = vmatpush.msra.mxu0 0.0
    %660 = vmatpush.msra.mxu0 0.0
    %661 = vmatpush.msra.mxu0 0.0
    %662 = vmatpush.msra.mxu0 0.0
    %663 = vmatpush.msra.mxu0 0.0
    %664 = vmatpush.msra.mxu0 0.0
    %665 = vmatpush.msra.mxu0 0.0
    %666 = vmatpush.msra.mxu0 0.0
    %667 = vmatpush.msra.mxu0 0.0
    %668 = vmatpush.msra.mxu0 0.0
    %669 = vmatpush.msra.mxu0 0.0
    %670 = vmatpush.msra.mxu0 0.0
    %671 = vmatpush.msra.mxu0 0.0
    %672 = vmatpush.msra.mxu0 0.0
    %673 = vmatpush.msra.mxu0 %v650
    %674 = vmatmul.f32.gmra.mxu0 %v656
    %v675 = vpop.f32.mrf.mxu0
    %v676 = vadd.f32 0.0, %v675
    %677 = vdwg.mxu0
    %v678 = vld [vmem:[%s4] sm:$0x1]
    %v679 = vadd.f32 %v546, %v650
    %v681 = vperm.slane %v678, 0
    %v683 = vadd.f32 %v679, %v681
    %v684 = vmax.f32 %v683, 0.0
    %v685 = vadd.f32 %v546, %v676
    %v686 = vadd.f32 %v685, %v681
    %v687 = vmax.f32 %v686, 0.0
    %v688 = vld [vmem:[%s5] sm:$0x1]
    %v689 = vld [vmem:[#allocation2] sm:$0x1]
    %v691 = vperm.slane %v688, 0
    %v693 = vmul.f32 %v684, %v691
    %vm694 = vcmask 261120
    %v695 = vsel %vm694, %v693, 0.0
    %696 = vadd.xlane.f32.xlu0 %v695
    %v697 = vpop.xlane.xlu0 %696
    %v699 = vperm.slane %v689, 0
    %v701 = vadd.f32 %v697, %v699
    %v702 = vmul.f32 %v687, %v691
    %v703 = vsel %vm694, %v702, 0.0
    %704 = vadd.xlane.f32.xlu0 %v703
    %v705 = vpop.xlane.xlu0 %704
    %v706 = vadd.f32 %v705, %v699
    %vm707 = vcmask 7168
    %v708 = vsel %vm707, %v701, 0.0
    %v709 = vrot.slane %v708, 4
    %v710 = vadd.f32 %v708, %v709
    %v711 = vrot.slane %v710, 2
    %v712 = vadd.f32 %v710, %v711
    %v713 = vrot.slane %v712, 1
    %v714 = vadd.f32 %v712, %v713
    %v715 = vmul.f32 %v714, 0.125
    %v716 = vsel %vm707, %v706, -inf
    %v717 = vrot.slane %v716, 4
    %v718 = vmax.f32 %v716, %v717
    %v719 = vrot.slane %v718, 2
    %v720 = vmax.f32 %v718, %v719
    %v721 = vrot.slane %v720, 1
    %v722 = vmax.f32 %v720, %v721
    %v723 = vsub.f32 %v706, %v722
    %v724 = vmul.f32 %v723, 1.442695
    %v725 = vpow.pop %v724
    %v726 = vsel %vm707, %v725, 0.0
    %v727 = vrot.slane %v726, 4
    %v728 = vadd.f32 %v726, %v727
    %v729 = vrot.slane %v728, 2
    %v730 = vadd.f32 %v728, %v729
    %v731 = vrot.slane %v730, 1
    %v732 = vadd.f32 %v730, %v731
    %v733 = vmul.f32 %v732, 0.125
    %v734 = vlog2.pop %v733
    %v735 = vmul.f32 %v734, 0.6931472
    %v736 = vadd.f32 %v722, %v735
    %v737 = vsub.f32 %v715, %v736
    %vm738 = vcmask 0
    %739 = vst.msk [vmem:[#allocation3] sm:$0x1] %vm738, %v737
    // Predicated region
    $region30: #{mine_forward.1} parent=1 // pred_check
      _
    $region31: #{mine_forward.1} parent=1 // pred_check_branch
      %741 = sbr.rel (0) target = $region33
    $region32: #{mine_forward.1} parent=1 // pred_region
      %743 = vsyncadd [#allocation4], 0
      %s745 = sshll.u32 [#allocation3], 4
      %s746 = int_to_ptr.vmem [resolvable:$true] %s745
      %s747 = sshll.u32 %s7, 4
      %s748 = int_to_ptr.hbm [resolvable:$true] %s747
      %750 = dma.vmem_to_hbm [thread:$0]  %s746, 16, %s748, [#allocation4]
    $region33: #{mine_forward.1} parent=1 // pred_fallthru
      _
    // Predicated region
    $region34: #{mine_forward.1} parent=1 // pred_check
      _
    $region35: #{mine_forward.1} parent=1 // pred_check_branch
      %752 = sbr.rel (0) target = $region37
    $region36: #{mine_forward.1} parent=1 // pred_region
      %754 = dma.done [#allocation4], 16
    $region37: #{mine_forward.1} parent=1 // pred_fallthru
      _
    %755 = vsyncpa [#allocation4], 1

</llo_original>
